<compile_context>
chip_gen: v7x
topology: tpu7x:2x2x1
jax: 0.10.0
libtpu: 0.0.40
codegen_flags: <defaults>
</compile_context>

<pallas_src>
import functools

import jax
import jax.numpy as jnp
from jax.experimental import pallas as pl
from jax.experimental.pallas import tpu as pltpu


def scse_kernel(use_mxu_spatial, x_ref, w1_ref, b1_ref, w2t_ref, b2_ref,
                wspa_ref, o_ref):
    # x_ref: (Bc, C, HW) — one batch chunk per grid step (streamed by BlockSpec).
    x = x_ref[...]
    xf = x.astype(jnp.float32)          # accumulate in f32 even for bf16 inputs
    Bc, C, HW = xf.shape

    # ---- channel squeeze: global average pool over the spatial (lane) axis.
    pooled = jnp.mean(xf, axis=-1)                                      # (Bc, C)

    # ---- channel excitation MLP (C -> C/r -> C).  Shapes are tiny, so keep it
    #      on the VPU/XLU as broadcast-multiplies + reductions (no serialized
    #      MXU round trips on the pool -> gate chain).
    h = jnp.sum(pooled[:, None, :] * w1_ref[...][None, :, :], axis=-1)  # (Bc, Cr)
    h = jnp.maximum(h + b1_ref[...], 0.0)                               # ReLU
    g = jnp.sum(h[:, :, None] * w2t_ref[...][None, :, :], axis=1)       # (Bc, C)
    chn_gate = jax.nn.sigmoid(g + b2_ref[...])                          # (Bc, C)

    # ---- spatial squeeze: 1x1 conv (C -> 1, no bias).
    if use_mxu_spatial:
        # Large C: contract over C on the (otherwise idle) MXU — avoids
        # materializing a block-sized product and the sublane reduce.
        # wspa_ref is (1, C); batched (1, C) @ (C, HW) per batch element.
        wspa_b = jnp.broadcast_to(wspa_ref[...][None, :, :], (Bc, 1, C))
        spa_logit = jax.lax.dot_general(
            wspa_b, xf,
            dimension_numbers=(((2,), (1,)), ((0,), (0,))),
            preferred_element_type=jnp.float32,
            precision=jax.lax.Precision.HIGHEST,
        )                                                              # (Bc, 1, HW)
    else:
        # Small C: VPU broadcast-multiply + sublane reduce (exact f32; an M=1
        # MXU matmul buys nothing here).  wspa_ref is (C, 1).
        spa_logit = jnp.sum(xf * wspa_ref[...][None, :, :], axis=1,
                            keepdims=True)                             # (Bc, 1, HW)
    spa_gate = jax.nn.sigmoid(spa_logit)

    # ---- fused epilogue: x*chn + x*spa == x * (chn + spa).  The broadcast
    #      gate slab is one block-sized temporary; blocks are kept small
    #      (<= ~4 MiB) so this fits comfortably even in v7x's scoped VMEM.
    o_ref[...] = (xf * (chn_gate[:, :, None] + spa_gate)).astype(o_ref.dtype)


def _vmem_limit_bytes():
    """Generation-aware scoped-VMEM limit (3/4 of physical, capped ~100 MiB)."""
    try:
        cap = int(pltpu.get_tpu_info().vmem_capacity_bytes)
    except Exception:
        cap = 64 * 1024 * 1024      # conservative fallback (v7x per-TC physical)
    return int(min(cap * 3 // 4, 100 * 1024 * 1024))


def _pick_num_chunks(B, bytes_per_batch_elem, vmem_limit):
    """Number of grid steps along batch (always divides B).

    Peak VMEM per step is ~6 block-sized buffers (2x double-buffered input,
    2x output, ~2 in-kernel slab temporaries), so the hard cap on one block is
    vmem_limit // 6.  The soft target keeps blocks at a few MiB so the
    ~0.35 us per-step overhead is negligible while still producing
    >= min(B, 8) steps; even step counts are preferred (v7x has 2 TensorCores).

    NOTE: if a *single* batch element's (C, HW) slab exceeds the hard cap
    (huge feature maps), an HW-tiled two-pass structure with an accumulated
    pooled sum would be needed instead of batch splitting.
    """
    hard_cap = max(bytes_per_batch_elem, vmem_limit // 6)
    soft_cap = min(hard_cap, 4 * 1024 * 1024)

    ncs = [n for n in range(1, B + 1) if B % n == 0]

    def feasible(cap):
        return [n for n in ncs if (B // n) * bytes_per_batch_elem <= cap]

    cands = feasible(soft_cap) or feasible(hard_cap) or [B]
    want = min(B, 8)
    even = [n for n in cands if n >= want and n % 2 == 0]
    anyn = [n for n in cands if n >= want]
    if even:
        return min(even)
    if anyn:
        return min(anyn)
    even_all = [n for n in cands if n % 2 == 0]
    return max(even_all) if even_all else max(cands)


def scse_block(x, w1, b1, w2, b2, w_spa, *, num_chunks=None):
    """x: (B, C, H, W). Weights in PyTorch (out, in) convention.

    Output dtype follows x.dtype: pass bf16 x to halve HBM streaming
    (in-kernel accumulations stay f32).
    """
    B, C, H, W = x.shape
    HW = H * W
    Cr = w1.shape[0]

    # Stream x unpadded: the block's last two dims equal the full (C, HW), so
    # no pad / post-slice HBM passes are needed.
    x_flat = x.reshape(B, C, HW)

    # Parameter layouts chosen so the kernel needs no in-kernel transposes.
    use_mxu_spatial = C >= 128
    w1_m = w1.reshape(Cr, C).astype(jnp.float32)                   # (Cr, C)
    b1_row = b1.reshape(1, Cr).astype(jnp.float32)
    w2_t = jnp.transpose(w2.reshape(C, Cr)).astype(jnp.float32)    # (Cr, C)
    b2_row = b2.reshape(1, C).astype(jnp.float32)
    wspa_m = (w_spa.reshape(1, C) if use_mxu_spatial
              else w_spa.reshape(C, 1)).astype(jnp.float32)

    vmem_limit = _vmem_limit_bytes()
    if num_chunks is None:
        num_chunks = _pick_num_chunks(B, C * HW * 4, vmem_limit)
    if B % num_chunks != 0:
        raise ValueError(
            f"num_chunks={num_chunks} must evenly divide batch size B={B}")
    Bc = B // num_chunks

    itemsize = jnp.dtype(x.dtype).itemsize
    cost = pl.CostEstimate(
        flops=5 * B * C * HW,                      # pool + spatial conv + epilogue
        transcendentals=B * HW + B * C,            # spatial + channel sigmoids
        bytes_accessed=2 * B * C * HW * itemsize + (2 * Cr * C + Cr + 2 * C) * 4,
    )

    wspa_spec = (pl.BlockSpec((1, C), lambda i: (0, 0)) if use_mxu_spatial
                 else pl.BlockSpec((C, 1), lambda i: (0, 0)))

    out = pl.pallas_call(
        functools.partial(scse_kernel, use_mxu_spatial),
        out_shape=jax.ShapeDtypeStruct((B, C, HW), x.dtype),
        grid_spec=pl.GridSpec(
            grid=(num_chunks,),
            in_specs=[
                pl.BlockSpec((Bc, C, HW), lambda i: (i, 0, 0)),    # x batch chunk
                pl.BlockSpec((Cr, C), lambda i: (0, 0)),           # w1
                pl.BlockSpec((1, Cr), lambda i: (0, 0)),           # b1
                pl.BlockSpec((Cr, C), lambda i: (0, 0)),           # w2^T
                pl.BlockSpec((1, C), lambda i: (0, 0)),            # b2
                wspa_spec,                                         # spatial conv w
            ],
            out_specs=pl.BlockSpec((Bc, C, HW), lambda i: (i, 0, 0)),
        ),
        compiler_params=pltpu.CompilerParams(
            dimension_semantics=("parallel",),
            vmem_limit_bytes=vmem_limit,
        ),
        cost_estimate=cost,
    )(x_flat, w1_m, b1_row, w2_t, b2_row, wspa_m)

    return out.reshape(B, C, H, W)


def scse_reference(x, w1, b1, w2, b2, w_spa):
    """Pure-JAX reference matching the PyTorch forward exactly."""
    B, C, H, W = x.shape
    pooled = jnp.mean(x, axis=(2, 3))                         # (B, C)
    h = jnp.maximum(pooled @ w1.T + b1, 0.0)                  # (B, Cr)
    chn = jax.nn.sigmoid(h @ w2.T + b2)                       # (B, C)
    chn_se = x * chn[:, :, None, None]
    spa = jax.nn.sigmoid(jnp.einsum('bchw,c->bhw', x, w_spa.reshape(C)))
    spa_se = x * spa[:, None, :, :]
    return chn_se + spa_se


if __name__ == "__main__":
    # shapes consistent with SCSEBlock(channel=32, reduction=16)
    B, C, H, W = 2, 32, 16, 16
    reduction = 16
    Cr = C // reduction                                        # 2

    key = jax.random.PRNGKey(0)
    kx, k1, kb1, k2, kb2, ks = jax.random.split(key, 6)

    x = jax.random.normal(kx, (B, C, H, W), dtype=jnp.float32)
    # Deterministic synthetic parameters (PyTorch (out, in) layout for Linear)
    w1 = jax.random.normal(k1, (Cr, C), dtype=jnp.float32) * 0.1   # Linear(C, Cr).weight
    b1 = jax.random.normal(kb1, (Cr,), dtype=jnp.float32) * 0.1    # Linear(C, Cr).bias
    w2 = jax.random.normal(k2, (C, Cr), dtype=jnp.float32) * 0.1   # Linear(Cr, C).weight
    b2 = jax.random.normal(kb2, (C,), dtype=jnp.float32) * 0.1     # Linear(Cr, C).bias
    w_spa = jax.random.normal(ks, (1, C, 1, 1), dtype=jnp.float32) * 0.1  # Conv2d(C,1,1)

    out = scse_block(x, w1, b1, w2, b2, w_spa)
    out = jax.block_until_ready(out)

    ref = scse_reference(x, w1, b1, w2, b2, w_spa)
    assert out.shape == (B, C, H, W)
    assert jnp.allclose(out, ref, atol=1e-5, rtol=1e-5), "mismatch vs reference"

    print("KERNEL_OK")
</pallas_src>

<mosaic_0001>
module attributes {stable_mosaic.version = 11 : i64} {
  func.func @scse_kernel(%arg0: i32, %arg1: memref<1x32x256xf32, #tpu.memory_space<vmem>>, %arg2: memref<2x32xf32, #tpu.memory_space<vmem>>, %arg3: memref<1x2xf32, #tpu.memory_space<vmem>>, %arg4: memref<2x32xf32, #tpu.memory_space<vmem>>, %arg5: memref<1x32xf32, #tpu.memory_space<vmem>>, %arg6: memref<32x1xf32, #tpu.memory_space<vmem>>, %arg7: memref<1x32x256xf32, #tpu.memory_space<vmem>>) attributes {dimension_semantics = [#tpu.dimension_semantics<parallel>], iteration_bounds = array<i64: 2>, scalar_prefetch = 0 : i64, scratch_operands = 0 : i64, tpu.core_type = #tpu.core_type<tc>, window_params = [{transform_indices = @transform_0, window_bounds = array<i64: 1, 32, 256>}, {pipeline_mode = #tpu.pipeline_mode<synchronous>, transform_indices = @transform_1, window_bounds = array<i64: 2, 32>}, {pipeline_mode = #tpu.pipeline_mode<synchronous>, transform_indices = @transform_2, window_bounds = array<i64: 1, 2>}, {pipeline_mode = #tpu.pipeline_mode<synchronous>, transform_indices = @transform_3, window_bounds = array<i64: 2, 32>}, {pipeline_mode = #tpu.pipeline_mode<synchronous>, transform_indices = @transform_4, window_bounds = array<i64: 1, 32>}, {pipeline_mode = #tpu.pipeline_mode<synchronous>, transform_indices = @transform_5, window_bounds = array<i64: 32, 1>}, {transform_indices = @transform_6, window_bounds = array<i64: 1, 32, 256>}]} {
    %c0 = arith.constant 0 : index
    %c0_0 = arith.constant 0 : index
    %c0_1 = arith.constant 0 : index
    %0 = vector.load %arg1[%c0, %c0_0, %c0_1] : memref<1x32x256xf32, #tpu.memory_space<vmem>>, vector<1x32x256xf32>
    %cst = arith.constant dense<0.000000e+00> : vector<1x32xf32>
    %1 = vector.multi_reduction <add>, %0, %cst [2] : vector<1x32x256xf32> to vector<1x32xf32>
    %cst_2 = arith.constant 2.560000e+02 : f32
    %2 = vector.broadcast %cst_2 : f32 to vector<1x32xf32>
    %3 = arith.divf %1, %2 : vector<1x32xf32>
    %4 = vector.shape_cast %3 : vector<1x32xf32> to vector<1x1x32xf32>
    %c0_3 = arith.constant 0 : index
    %c0_4 = arith.constant 0 : index
    %5 = vector.load %arg2[%c0_3, %c0_4] : memref<2x32xf32, #tpu.memory_space<vmem>>, vector<2x32xf32>
    %6 = vector.shape_cast %5 : vector<2x32xf32> to vector<1x2x32xf32>
    %7 = vector.broadcast %4 : vector<1x1x32xf32> to vector<1x2x32xf32>
    %8 = arith.mulf %7, %6 : vector<1x2x32xf32>
    %cst_5 = arith.constant dense<0.000000e+00> : vector<1x2xf32>
    %9 = vector.multi_reduction <add>, %8, %cst_5 [2] : vector<1x2x32xf32> to vector<1x2xf32>
    %c0_6 = arith.constant 0 : index
    %c0_7 = arith.constant 0 : index
    %10 = vector.load %arg3[%c0_6, %c0_7] : memref<1x2xf32, #tpu.memory_space<vmem>>, vector<1x2xf32>
    %11 = arith.addf %9, %10 : vector<1x2xf32>
    %cst_8 = arith.constant 0.000000e+00 : f32
    %12 = vector.broadcast %cst_8 : f32 to vector<1x2xf32>
    %13 = arith.maximumf %11, %12 : vector<1x2xf32>
    %14 = vector.shape_cast %13 : vector<1x2xf32> to vector<1x2x1xf32>
    %c0_9 = arith.constant 0 : index
    %c0_10 = arith.constant 0 : index
    %15 = vector.load %arg4[%c0_9, %c0_10] : memref<2x32xf32, #tpu.memory_space<vmem>>, vector<2x32xf32>
    %16 = vector.shape_cast %15 : vector<2x32xf32> to vector<1x2x32xf32>
    %17 = vector.broadcast %14 : vector<1x2x1xf32> to vector<1x2x32xf32>
    %18 = arith.mulf %17, %16 : vector<1x2x32xf32>
    %cst_11 = arith.constant dense<0.000000e+00> : vector<1x32xf32>
    %19 = vector.multi_reduction <add>, %18, %cst_11 [1] : vector<1x2x32xf32> to vector<1x32xf32>
    %c0_12 = arith.constant 0 : index
    %c0_13 = arith.constant 0 : index
    %20 = vector.load %arg5[%c0_12, %c0_13] : memref<1x32xf32, #tpu.memory_space<vmem>>, vector<1x32xf32>
    %21 = arith.addf %19, %20 : vector<1x32xf32>
    %22 = arith.negf %21 : vector<1x32xf32>
    %23 = math.exp %22 : vector<1x32xf32>
    %cst_14 = arith.constant 1.000000e+00 : f32
    %24 = vector.broadcast %cst_14 : f32 to vector<1x32xf32>
    %25 = arith.addf %24, %23 : vector<1x32xf32>
    %26 = arith.divf %24, %25 : vector<1x32xf32>
    %c0_15 = arith.constant 0 : index
    %c0_16 = arith.constant 0 : index
    %27 = vector.load %arg6[%c0_15, %c0_16] : memref<32x1xf32, #tpu.memory_space<vmem>>, vector<32x1xf32>
    %28 = vector.shape_cast %27 : vector<32x1xf32> to vector<1x32x1xf32>
    %29 = vector.broadcast %28 : vector<1x32x1xf32> to vector<1x32x256xf32>
    %30 = arith.mulf %0, %29 : vector<1x32x256xf32>
    %cst_17 = arith.constant dense<0.000000e+00> : vector<1x256xf32>
    %31 = vector.multi_reduction <add>, %30, %cst_17 [1] : vector<1x32x256xf32> to vector<1x256xf32>
    %32 = vector.shape_cast %31 : vector<1x256xf32> to vector<1x1x256xf32>
    %33 = arith.negf %32 : vector<1x1x256xf32>
    %34 = math.exp %33 : vector<1x1x256xf32>
    %cst_18 = arith.constant 1.000000e+00 : f32
    %35 = vector.broadcast %cst_18 : f32 to vector<1x1x256xf32>
    %36 = arith.addf %35, %34 : vector<1x1x256xf32>
    %37 = arith.divf %35, %36 : vector<1x1x256xf32>
    %38 = vector.shape_cast %26 : vector<1x32xf32> to vector<1x32x1xf32>
    %39 = vector.broadcast %38 : vector<1x32x1xf32> to vector<1x32x256xf32>
    %40 = vector.broadcast %37 : vector<1x1x256xf32> to vector<1x32x256xf32>
    %41 = arith.addf %39, %40 : vector<1x32x256xf32>
    %42 = arith.mulf %0, %41 : vector<1x32x256xf32>
    %c0_19 = arith.constant 0 : index
    %c0_20 = arith.constant 0 : index
    %c0_21 = arith.constant 0 : index
    %43 = vector.load %arg7[%c0_19, %c0_20, %c0_21] : memref<1x32x256xf32, #tpu.memory_space<vmem>>, vector<1x32x256xf32>
    tpu.vector_store %arg7[%c0_19, %c0_20, %c0_21], %42 {strides = array<i32>} : memref<1x32x256xf32, #tpu.memory_space<vmem>>, vector<1x32x256xf32>,
    return
  }
  func.func @transform_0(%arg0: i32) -> (i32, i32, i32) {
    %c0_i32 = arith.constant 0 : i32
    %c0_i32_0 = arith.constant 0 : i32
    %c0_i32_1 = arith.constant 0 : i32
    return %arg0, %c0_i32, %c0_i32_0 : i32, i32, i32
  }
  func.func @transform_1(%arg0: i32) -> (i32, i32) {
    %c0_i32 = arith.constant 0 : i32
    %c0_i32_0 = arith.constant 0 : i32
    %c0_i32_1 = arith.constant 0 : i32
    return %c0_i32, %c0_i32_0 : i32, i32
  }
  func.func @transform_2(%arg0: i32) -> (i32, i32) {
    %c0_i32 = arith.constant 0 : i32
    %c0_i32_0 = arith.constant 0 : i32
    %c0_i32_1 = arith.constant 0 : i32
    return %c0_i32, %c0_i32_0 : i32, i32
  }
  func.func @transform_3(%arg0: i32) -> (i32, i32) {
    %c0_i32 = arith.constant 0 : i32
    %c0_i32_0 = arith.constant 0 : i32
    %c0_i32_1 = arith.constant 0 : i32
    return %c0_i32, %c0_i32_0 : i32, i32
  }
  func.func @transform_4(%arg0: i32) -> (i32, i32) {
    %c0_i32 = arith.constant 0 : i32
    %c0_i32_0 = arith.constant 0 : i32
    %c0_i32_1 = arith.constant 0 : i32
    return %c0_i32, %c0_i32_0 : i32, i32
  }
  func.func @transform_5(%arg0: i32) -> (i32, i32) {
    %c0_i32 = arith.constant 0 : i32
    %c0_i32_0 = arith.constant 0 : i32
    %c0_i32_1 = arith.constant 0 : i32
    return %c0_i32, %c0_i32_0 : i32, i32
  }
  func.func @transform_6(%arg0: i32) -> (i32, i32, i32) {
    %c0_i32 = arith.constant 0 : i32
    %c0_i32_0 = arith.constant 0 : i32
    %c0_i32_1 = arith.constant 0 : i32
    return %arg0, %c0_i32, %c0_i32_0 : i32, i32, i32
  }
}

</mosaic_0001>

<llo_original>
// kernel: tpu_custom_call.1
$region0: #{tpu_custom_call.1}
  #allocation0 [shape = 'u32[]', space=smem, size = 0x4, offset = 0x4, fixed_abs, tag = 'smem constant byte address 0x4 - core index']
  #allocation1 [shape = 'u32[144,128]{1,0:T(1,128)}', space=vmem, size = 0x12000, scoped, tag = 'internal scratch']
  %s0 = inlined_call_operand.hbm [shape: f32[2,32,256], index: 0, kind: input, shape index: {}]
  %s1 = inlined_call_operand.vmem [shape: f32[2,32], index: 1, kind: input, shape index: {}]
  %s2 = inlined_call_operand.vmem [shape: f32[1,2], index: 2, kind: input, shape index: {}]
  %s3 = inlined_call_operand.vmem [shape: f32[2,32], index: 3, kind: input, shape index: {}]
  %s4 = inlined_call_operand.vmem [shape: f32[1,32], index: 4, kind: input, shape index: {}]
  %s5 = inlined_call_operand.vmem [shape: f32[32,1], index: 5, kind: input, shape index: {}]
  %s6 = inlined_call_operand.hbm [shape: f32[2,32,256], index: 6, kind: output, shape index: {}]
  %s7 = sld [smem:[#allocation0]]
  $region61: #{tpu_custom_call.1} parent=0
    _
  %s9 = ssub.s32 1, %s7
  %s10 = scalar_select 0, %s9, %s7
  $region1: #{tpu_custom_call.1} parent=0
    #allocation2 [shape = 'u8[65536]{0}', space=vmem, size = 0x10000, scoped, tag = 'input window, operand 0']
    #allocation3 [shape = 's32[2]{0}', space=sflag, size = 0x8, scoped, tag = 'scoped memory for tpu_custom_call.1']
    #allocation4 [shape = 's32[2]{0}', space=sflag, size = 0x8, scoped, tag = 'scoped memory for tpu_custom_call.1']
    #allocation5 [shape = 'u8[65536]{0}', space=vmem, size = 0x10000, scoped, tag = 'output window, operand 0']
    %11 = vsyncpa [#allocation3], 0
    %s12 = scalar_lea.sflag [#allocation3], 1
    %13 = vsyncpa %s12, 0
    %14 = vsyncpa [#allocation4], 0
    %s15 = scalar_lea.sflag [#allocation4], 1
    %16 = vsyncpa %s15, 0
    loop: start=0, step=1, limit=4
    $region2: #{tpu_custom_call.1} parent=1 // loop_pre_header
      _
    $region3: #{tpu_custom_call.1} parent=1 // loop_header
      %s18 = sphi 0, %s22
      %p19 = scmp.ge.s32.totalorder %s18, 4
      %s28 = sphi 0, %s30
      %s31 = sphi 0, %s28
      %s32 = sphi 0, %s31
      %s48 = sphi 0, %s32
      %s52 = sphi 0, %s52
      %s54 = sphi 0, %s52
      %s55 = sphi 0, %s54
      %s69 = sphi 0, %s55
      %s73 = sphi 0, %s73
      %s75 = sphi 0, %s73
      %s76 = sphi 0, %s75
      %s90 = sphi 0, %s76
      %s94 = sphi 0, %s94
      %s96 = sphi 0, %s94
      %s97 = sphi 0, %s96
      %s111 = sphi 0, %s97
      %s115 = sphi 0, %s115
      %s117 = sphi 0, %s115
      %s118 = sphi 0, %s117
      %s132 = sphi 0, %s118
      %s136 = sphi 0, %s136
      %s138 = sphi 0, %s136
      %s139 = sphi 0, %s138
      %s153 = sphi 0, %s139
      %s159 = sphi 0, %s161
      %s162 = sphi 0, %s159
      %s163 = sphi 0, %s162
      %s179 = sphi 0, %s163
    $region4: #{tpu_custom_call.1} parent=1 // loop_header_branch
      %21 = sbr.rel (%p19) target = $region8
    $region5: #{tpu_custom_call.1} parent=1 // loop_body
      %s23 = ssub.s32 %s18, 1
      %s24 = ssub.s32 %s18, 2
      %s25 = sadd.s32 %s18, 1
      %s26 = ssub.s32 %s18, %s25
      %p27 = scmp.eq.s32.totalorder %s26, 0
      %s29 = sadd.s32 %s28, 1
      %s30 = scalar_select %p27, %s28, %s29
      %p33 = pneg %p27
      %p34 = scmp.eq.s32.totalorder %s18, 1
      %p35 = por %p33, %p34
      %p36 = scmp.ne.s32.totalorder %s28, %s31
      %p37 = scmp.eq.s32.totalorder %s18, 0
      %p38 = por %p36, %p37
      %p39 = scmp.ne.s32.totalorder %s28, %s31
      %p40 = scmp.eq.s32.totalorder %s23, 1
      %p41 = por %p39, %p40
      %p42 = scmp.ne.s32.totalorder %s31, %s32
      %p43 = scmp.eq.s32.totalorder %s23, 0
      %p44 = por %p42, %p43
      %p45 = scmp.ne.s32.totalorder %s31, %s32
      %p46 = scmp.eq.s32.totalorder %s24, 1
      %p47 = por %p45, %p46
      %p49 = scmp.ne.s32.totalorder %s32, %s48
      %p50 = scmp.eq.s32.totalorder %s24, 0
      %p51 = por %p49, %p50
      %s53 = sadd.s32 %s52, 1
      %p56 = scmp.eq.s32.totalorder %s18, 1
      %p57 = scmp.ne.s32.totalorder %s52, %s54
      %p58 = scmp.eq.s32.totalorder %s18, 0
      %p59 = por %p57, %p58
      %p60 = scmp.ne.s32.totalorder %s52, %s54
      %p61 = scmp.eq.s32.totalorder %s23, 1
      %p62 = por %p60, %p61
      %p63 = scmp.ne.s32.totalorder %s54, %s55
      %p64 = scmp.eq.s32.totalorder %s23, 0
      %p65 = por %p63, %p64
      %p66 = scmp.ne.s32.totalorder %s54, %s55
      %p67 = scmp.eq.s32.totalorder %s24, 1
      %p68 = por %p66, %p67
      %p70 = scmp.ne.s32.totalorder %s55, %s69
      %p71 = scmp.eq.s32.totalorder %s24, 0
      %p72 = por %p70, %p71
      %s74 = sadd.s32 %s73, 1
      %p77 = scmp.eq.s32.totalorder %s18, 1
      %p78 = scmp.ne.s32.totalorder %s73, %s75
      %p79 = scmp.eq.s32.totalorder %s18, 0
      %p80 = por %p78, %p79
      %p81 = scmp.ne.s32.totalorder %s73, %s75
      %p82 = scmp.eq.s32.totalorder %s23, 1
      %p83 = por %p81, %p82
      %p84 = scmp.ne.s32.totalorder %s75, %s76
      %p85 = scmp.eq.s32.totalorder %s23, 0
      %p86 = por %p84, %p85
      %p87 = scmp.ne.s32.totalorder %s75, %s76
      %p88 = scmp.eq.s32.totalorder %s24, 1
      %p89 = por %p87, %p88
      %p91 = scmp.ne.s32.totalorder %s76, %s90
      %p92 = scmp.eq.s32.totalorder %s24, 0
      %p93 = por %p91, %p92
      %s95 = sadd.s32 %s94, 1
      %p98 = scmp.eq.s32.totalorder %s18, 1
      %p99 = scmp.ne.s32.totalorder %s94, %s96
      %p100 = scmp.eq.s32.totalorder %s18, 0
      %p101 = por %p99, %p100
      %p102 = scmp.ne.s32.totalorder %s94, %s96
      %p103 = scmp.eq.s32.totalorder %s23, 1
      %p104 = por %p102, %p103
      %p105 = scmp.ne.s32.totalorder %s96, %s97
      %p106 = scmp.eq.s32.totalorder %s23, 0
      %p107 = por %p105, %p106
      %p108 = scmp.ne.s32.totalorder %s96, %s97
      %p109 = scmp.eq.s32.totalorder %s24, 1
      %p110 = por %p108, %p109
      %p112 = scmp.ne.s32.totalorder %s97, %s111
      %p113 = scmp.eq.s32.totalorder %s24, 0
      %p114 = por %p112, %p113
      %s116 = sadd.s32 %s115, 1
      %p119 = scmp.eq.s32.totalorder %s18, 1
      %p120 = scmp.ne.s32.totalorder %s115, %s117
      %p121 = scmp.eq.s32.totalorder %s18, 0
      %p122 = por %p120, %p121
      %p123 = scmp.ne.s32.totalorder %s115, %s117
      %p124 = scmp.eq.s32.totalorder %s23, 1
      %p125 = por %p123, %p124
      %p126 = scmp.ne.s32.totalorder %s117, %s118
      %p127 = scmp.eq.s32.totalorder %s23, 0
      %p128 = por %p126, %p127
      %p129 = scmp.ne.s32.totalorder %s117, %s118
      %p130 = scmp.eq.s32.totalorder %s24, 1
      %p131 = por %p129, %p130
      %p133 = scmp.ne.s32.totalorder %s118, %s132
      %p134 = scmp.eq.s32.totalorder %s24, 0
      %p135 = por %p133, %p134
      %s137 = sadd.s32 %s136, 1
      %p140 = scmp.eq.s32.totalorder %s18, 1
      %p141 = scmp.ne.s32.totalorder %s136, %s138
      %p142 = scmp.eq.s32.totalorder %s18, 0
      %p143 = por %p141, %p142
      %p144 = scmp.ne.s32.totalorder %s136, %s138
      %p145 = scmp.eq.s32.totalorder %s23, 1
      %p146 = por %p144, %p145
      %p147 = scmp.ne.s32.totalorder %s138, %s139
      %p148 = scmp.eq.s32.totalorder %s23, 0
      %p149 = por %p147, %p148
      %p150 = scmp.ne.s32.totalorder %s138, %s139
      %p151 = scmp.eq.s32.totalorder %s24, 1
      %p152 = por %p150, %p151
      %p154 = scmp.ne.s32.totalorder %s139, %s153
      %p155 = scmp.eq.s32.totalorder %s24, 0
      %p156 = por %p154, %p155
      %s157 = ssub.s32 %s18, %s25
      %p158 = scmp.eq.s32.totalorder %s157, 0
      %s160 = sadd.s32 %s159, 1
      %s161 = scalar_select %p158, %s159, %s160
      %p164 = pneg %p158
      %p165 = scmp.eq.s32.totalorder %s18, 1
      %p166 = por %p164, %p165
      %p167 = scmp.ne.s32.totalorder %s159, %s162
      %p168 = scmp.eq.s32.totalorder %s18, 0
      %p169 = por %p167, %p168
      %p170 = scmp.ne.s32.totalorder %s159, %s162
      %p171 = scmp.eq.s32.totalorder %s23, 1
      %p172 = por %p170, %p171
      %p173 = scmp.ne.s32.totalorder %s162, %s163
      %p174 = scmp.eq.s32.totalorder %s23, 0
      %p175 = por %p173, %p174
      %p176 = scmp.ne.s32.totalorder %s162, %s163
      %p177 = scmp.eq.s32.totalorder %s24, 1
      %p178 = por %p176, %p177
      %p180 = scmp.ne.s32.totalorder %s163, %s179
      %p181 = scmp.eq.s32.totalorder %s24, 0
      %p182 = por %p180, %p181
      %p183 = scmp.le.s32.totalorder 1, %s18
      %p184 = scmp.lt.s32.totalorder %s18, 3
      %p185 = pnand %p183, %p184
      %p186 = pneg %p185
      // Predicated region
      $region9: #{tpu_custom_call.1} parent=5 // pred_check
        _
      $region10: #{tpu_custom_call.1} parent=5 // pred_check_branch
        %188 = sbr.rel (%p185) target = $region12
      $region11: #{tpu_custom_call.1} parent=5 // pred_region
        %s189 = ssub.s32 %s18, 1
        // Predicated region
        $region13: #{tpu_custom_call.1} parent=11 // pred_check
          %p190 = pneg %p65
        $region14: #{tpu_custom_call.1} parent=11 // pred_check_branch
          %192 = sbr.rel (%p190) target = $region16
        $region15: #{tpu_custom_call.1} parent=11 // pred_region
          _
        $region16: #{tpu_custom_call.1} parent=11 // pred_fallthru
          _
        // Predicated region
        $region17: #{tpu_custom_call.1} parent=11 // pred_check
          %p193 = pneg %p86
        $region18: #{tpu_custom_call.1} parent=11 // pred_check_branch
          %195 = sbr.rel (%p193) target = $region20
        $region19: #{tpu_custom_call.1} parent=11 // pred_region
          _
        $region20: #{tpu_custom_call.1} parent=11 // pred_fallthru
          _
        // Predicated region
        $region21: #{tpu_custom_call.1} parent=11 // pred_check
          %p196 = pneg %p107
        $region22: #{tpu_custom_call.1} parent=11 // pred_check_branch
          %198 = sbr.rel (%p196) target = $region24
        $region23: #{tpu_custom_call.1} parent=11 // pred_region
          _
        $region24: #{tpu_custom_call.1} parent=11 // pred_fallthru
          _
        // Predicated region
        $region25: #{tpu_custom_call.1} parent=11 // pred_check
          %p199 = pneg %p128
        $region26: #{tpu_custom_call.1} parent=11 // pred_check_branch
          %201 = sbr.rel (%p199) target = $region28
        $region27: #{tpu_custom_call.1} parent=11 // pred_region
          _
        $region28: #{tpu_custom_call.1} parent=11 // pred_fallthru
          _
        // Predicated region
        $region29: #{tpu_custom_call.1} parent=11 // pred_check
          %p202 = pneg %p149
        $region30: #{tpu_custom_call.1} parent=11 // pred_check_branch
          %204 = sbr.rel (%p202) target = $region32
        $region31: #{tpu_custom_call.1} parent=11 // pred_region
          _
        $region32: #{tpu_custom_call.1} parent=11 // pred_fallthru
          _
      $region12: #{tpu_custom_call.1} parent=5 // pred_fallthru
        _
      %p205 = scmp.lt.s32.totalorder %s18, 2
      // Predicated region
      $region33: #{tpu_custom_call.1} parent=5 // pred_check
        %p206 = pneg %p205
      $region34: #{tpu_custom_call.1} parent=5 // pred_check_branch
        %208 = sbr.rel (%p206) target = $region36
      $region35: #{tpu_custom_call.1} parent=5 // pred_region
        // Predicated region
        $region37: #{tpu_custom_call.1} parent=35 // pred_check
          %p209 = pneg %p38
        $region38: #{tpu_custom_call.1} parent=35 // pred_check_branch
          %211 = sbr.rel (%p209) target = $region40
        $region39: #{tpu_custom_call.1} parent=35 // pred_region
          %s212 = sand.u32 %s28, 1
          %s213 = scalar_lea.sflag [#allocation3], %s212
          %s214 = sand.u32 %s28, 1
          %s215 = smul.addr %s214, 64
          %s216 = scalar_lea.vmem [#allocation2], %s215
          %s218 = ssub.s32 1024, 1024
          %219 = vsyncadd %s213, %s218
          %s220 = smul.addr %s18, 8
          %s221 = smul.addr %s220, 128
          %s222 = scalar_lea.hbm %s0, %s221
          %s223 = sshll.u32 %s216, 4
          %s224 = int_to_ptr.vmem [resolvable:$true] %s223
          %229 = dma.hbm_to_vmem [thread:$0]  %s222, 1024, %s224, %s213, 256, 256, 16
        $region40: #{tpu_custom_call.1} parent=35 // pred_fallthru
          _
      $region36: #{tpu_custom_call.1} parent=5 // pred_fallthru
        _
      %p230 = scmp.le.s32.totalorder 1, %s18
      %p231 = scmp.lt.s32.totalorder %s18, 3
      %p232 = pnand %p230, %p231
      %p233 = pneg %p232
      // Predicated region
      $region41: #{tpu_custom_call.1} parent=5 // pred_check
        _
      $region42: #{tpu_custom_call.1} parent=5 // pred_check_branch
        %235 = sbr.rel (%p232) target = $region44
      $region43: #{tpu_custom_call.1} parent=5 // pred_region
        %s236 = ssub.s32 %s18, 1
        %s237 = sand.u32 %s31, 1
        %s238 = scalar_lea.sflag [#allocation3], %s237
        %s239 = sand.u32 %s31, 1
        %s240 = smul.addr %s239, 64
        %s241 = scalar_lea.vmem [#allocation2], %s240
        // Predicated region
        $region45: #{tpu_custom_call.1} parent=43 // pred_check
          %p242 = pneg %p44
        $region46: #{tpu_custom_call.1} parent=43 // pred_check_branch
          %244 = sbr.rel (%p242) target = $region48
        $region47: #{tpu_custom_call.1} parent=43 // pred_region
          %245 = dma.done %s238, 1024
        $region48: #{tpu_custom_call.1} parent=43 // pred_fallthru
          _
        %s246 = sand.u32 %s31, 1
        %s247 = scalar_lea.sflag [#allocation3], %s246
        %s248 = sand.u32 %s31, 1
        %s249 = smul.addr %s248, 64
        %s250 = scalar_lea.vmem [#allocation2], %s249
        %p251 = pneg %p44
        %p252 = pneg %p41
        %p253 = pneg %p65
        %p254 = pneg %p62
        %p255 = pneg %p86
        %p256 = pneg %p83
        %p257 = pneg %p107
        %p258 = pneg %p104
        %p259 = pneg %p128
        %p260 = pneg %p125
        %p261 = pneg %p149
        %p262 = pneg %p146
        %p263 = pneg %p175
        %p264 = pneg %p172
        %s265 = sand.u32 %s162, 1
        %s266 = scalar_lea.sflag [#allocation4], %s265
        %s267 = sand.u32 %s162, 1
        %s268 = smul.addr %s267, 64
        %s269 = scalar_lea.vmem [#allocation5], %s268
        %v270 = vld [vmem:[%s241] sm:$0xff]
        %v271 = vld [vmem:[%s241 + $0x8] sm:$0xff]
        %v272 = vld [vmem:[%s241 + $0x10] sm:$0xff]
        %v273 = vld [vmem:[%s241 + $0x18] sm:$0xff]
        %v274 = vld [vmem:[%s241 + $0x20] sm:$0xff]
        %v275 = vld [vmem:[%s241 + $0x28] sm:$0xff]
        %v276 = vld [vmem:[%s241 + $0x30] sm:$0xff]
        %v277 = vld [vmem:[%s241 + $0x38] sm:$0xff]
        %v278 = vadd.f32 %v270, %v271
        %279 = vadd.xlane.f32.xlu0 %v278
        %v280 = vpop.xlane.xlu0 %279
        %v281 = vadd.f32 %v272, %v273
        %282 = vadd.xlane.f32.xlu0 %v281
        %v283 = vpop.xlane.xlu0 %282
        %v284 = vadd.f32 %v274, %v275
        %285 = vadd.xlane.f32.xlu0 %v284
        %v286 = vpop.xlane.xlu0 %285
        %v287 = vadd.f32 %v276, %v277
        %288 = vadd.xlane.f32.xlu0 %v287
        %v289 = vpop.xlane.xlu0 %288
        %v290 = vrcp.pop 256.0
        %v291 = vmul.f32 %v280, %v290
        %v292 = vmul.f32 %v283, %v290
        %v293 = vmul.f32 %v286, %v290
        %v294 = vmul.f32 %v289, %v290
        %v295 = vld [vmem:[%s1] sm:$0x3]
        %v297 = vlaneseq
        %v298 = vshrl.u32 %v297, 7
        %v299 = vsub.s32 0, %v298
        %v300 = vrot.slane %v295, %v299
        %302 = vbcast.lane.b32.xlu0 %v300, 256
        %v303 = vpop.permute.xlu0 %302
        %s305 = sor.u32 256, 8
        %306 = vbcast.lane.b32.xlu0 %v300, %s305
        %v307 = vpop.permute.xlu0 %306
        %s309 = sor.u32 256, 16
        %310 = vbcast.lane.b32.xlu0 %v300, %s309
        %v311 = vpop.permute.xlu0 %310
        %s313 = sor.u32 256, 24
        %314 = vbcast.lane.b32.xlu0 %v300, %s313
        %v315 = vpop.permute.xlu0 %314
        %v316 = vlaneseq
        %v317 = vshrl.u32 %v316, 7
        %v318 = vsub.s32 1, %v317
        %v319 = vrot.slane %v295, %v318
        %321 = vbcast.lane.b32.xlu0 %v319, 256
        %v322 = vpop.permute.xlu0 %321
        %s324 = sor.u32 256, 8
        %325 = vbcast.lane.b32.xlu0 %v319, %s324
        %v326 = vpop.permute.xlu0 %325
        %s328 = sor.u32 256, 16
        %329 = vbcast.lane.b32.xlu0 %v319, %s328
        %v330 = vpop.permute.xlu0 %329
        %s332 = sor.u32 256, 24
        %333 = vbcast.lane.b32.xlu0 %v319, %s332
        %v334 = vpop.permute.xlu0 %333
        %v343 = vmul.f32 %v291, %v303
        %v344 = vmul.f32 %v292, %v307
        %v345 = vmul.f32 %v293, %v311
        %v346 = vmul.f32 %v294, %v315
        %v347 = vmul.f32 %v291, %v322
        %v348 = vmul.f32 %v292, %v326
        %v349 = vmul.f32 %v293, %v330
        %v350 = vmul.f32 %v294, %v334
        %359 = vset.pattern.permute.xlu0 0
        %360 = vperm.xlu0 %359, %v343
        %v361 = vpop.permute.xlu0 %360
        %362 = vset.pattern.permute.xlu0 0
        %363 = vperm.xlu0 %362, %v344
        %v364 = vpop.permute.xlu0 %363
        %365 = vset.pattern.permute.xlu0 0
        %366 = vperm.xlu0 %365, %v345
        %v367 = vpop.permute.xlu0 %366
        %368 = vset.pattern.permute.xlu0 0
        %369 = vperm.xlu0 %368, %v346
        %v370 = vpop.permute.xlu0 %369
        %371 = vset.pattern.permute.xlu0 0
        %372 = vperm.xlu0 %371, %v347
        %v373 = vpop.permute.xlu0 %372
        %374 = vset.pattern.permute.xlu0 0
        %375 = vperm.xlu0 %374, %v348
        %v376 = vpop.permute.xlu0 %375
        %377 = vset.pattern.permute.xlu0 0
        %378 = vperm.xlu0 %377, %v349
        %v379 = vpop.permute.xlu0 %378
        %380 = vset.pattern.permute.xlu0 0
        %381 = vperm.xlu0 %380, %v350
        %v382 = vpop.permute.xlu0 %381
        %v383 = vlaneseq
        %v384 = vand.u32 %v383, 127
        %v385 = vlaneseq
        %v386 = vshrl.u32 %v385, 7
        %v387 = vsub.s32 %v384, %v386
        %v388 = vrot.slane %v361, %v387
        %v389 = vadd.s32 %v384, 4294967288
        %v390 = vlaneseq
        %v391 = vshrl.u32 %v390, 7
        %v392 = vsub.s32 %v389, %v391
        %v393 = vrot.slane %v364, %v392
        %vm394 = vcmask 130112
        %v395 = vsel %vm394, %v393, %v388
        %v396 = vadd.s32 %v384, 4294967280
        %v397 = vlaneseq
        %v398 = vshrl.u32 %v397, 7
        %v399 = vsub.s32 %v396, %v398
        %v400 = vrot.slane %v367, %v399
        %vm401 = vcmask 195712
        %v402 = vsel %vm401, %v400, %v395
        %v403 = vadd.s32 %v384, 4294967272
        %v404 = vlaneseq
        %v405 = vshrl.u32 %v404, 7
        %v406 = vsub.s32 %v403, %v405
        %v407 = vrot.slane %v370, %v406
        %vm408 = vcmask 261312
        %v409 = vsel %vm408, %v407, %v402
        %v410 = vlaneseq
        %v411 = vshrl.u32 %v410, 7
        %v412 = vsub.s32 %v384, %v411
        %v413 = vrot.slane %v373, %v412
        %v414 = vlaneseq
        %v415 = vshrl.u32 %v414, 7
        %v416 = vsub.s32 %v389, %v415
        %v417 = vrot.slane %v376, %v416
        %v418 = vsel %vm394, %v417, %v413
        %v419 = vlaneseq
        %v420 = vshrl.u32 %v419, 7
        %v421 = vsub.s32 %v396, %v420
        %v422 = vrot.slane %v379, %v421
        %v423 = vsel %vm401, %v422, %v418
        %v424 = vlaneseq
        %v425 = vshrl.u32 %v424, 7
        %v426 = vsub.s32 %v403, %v425
        %v427 = vrot.slane %v382, %v426
        %v428 = vsel %vm408, %v427, %v423
        %vm429 = vcmask 1041409
        %v430 = vsel %vm429, %v428, %v409
        %vm432 = vcmask 254976
        %v433 = vsel %vm432, %v430, 0.0
        %434 = vadd.xlane.f32.xlu0 %v433
        %v435 = vpop.xlane.xlu0 %434
        %v436 = vld [vmem:[%s2] sm:$0x1]
        %v438 = vlaneseq
        %v439 = vshrl.u32 %v438, 7
        %v440 = vsub.s32 0, %v439
        %v441 = vrot.slane %v436, %v440
        %443 = vbcast.lane.b32.xlu0 %v441, 256
        %v444 = vpop.permute.xlu0 %443
        %v446 = vadd.f32 %v435, %v444
        %v447 = vmax.f32 %v446, 0.0
        %v448 = vld [vmem:[%s3] sm:$0x3]
        %450 = vset.pattern.permute.xlu0 0
        %451 = vperm.xlu0 %450, %v447
        %v452 = vpop.permute.xlu0 %451
        %v454 = vmul.f32 %v452, %v448
        %v455 = vsel %vm432, %v454, 0.0
        %v456 = vrot.slane %v455, 4
        %v457 = vadd.f32 %v455, %v456
        %v458 = vrot.slane %v457, 2
        %v459 = vadd.f32 %v457, %v458
        %v460 = vrot.slane %v459, 1
        %v461 = vadd.f32 %v459, %v460
        %v462 = vld [vmem:[%s4] sm:$0x1]
        %v463 = vadd.f32 %v461, %v462
        %v464 = vxor.u32 %v463, 2147483648
        %v465 = vmul.f32 %v464, 1.442695
        %v466 = vpow.pop %v465
        %v467 = vadd.f32 %v466, 1.0
        %v468 = vrcp.pop %v467
        %v469 = vmul.f32 1.0, %v468
        %v470 = vld [vmem:[%s5] sm:$0xff]
        %v471 = vld [vmem:[%s5 + $0x8] sm:$0xff]
        %v472 = vld [vmem:[%s5 + $0x10] sm:$0xff]
        %v473 = vld [vmem:[%s5 + $0x18] sm:$0xff]
        %475 = vset.pattern.permute.xlu0 0
        %476 = vperm.xlu0 %475, %v470
        %v477 = vpop.permute.xlu0 %476
        %480 = vset.pattern.permute.xlu0 0
        %481 = vperm.xlu0 %480, %v471
        %v482 = vpop.permute.xlu0 %481
        %485 = vset.pattern.permute.xlu0 0
        %486 = vperm.xlu0 %485, %v472
        %v487 = vpop.permute.xlu0 %486
        %490 = vset.pattern.permute.xlu0 0
        %491 = vperm.xlu0 %490, %v473
        %v492 = vpop.permute.xlu0 %491
        %v494 = vmul.f32 %v270, %v477
        %v495 = vmul.f32 %v271, %v477
        %v496 = vmul.f32 %v272, %v482
        %v497 = vmul.f32 %v273, %v482
        %v498 = vmul.f32 %v274, %v487
        %v499 = vmul.f32 %v275, %v487
        %v500 = vmul.f32 %v276, %v492
        %v501 = vmul.f32 %v277, %v492
        %v502 = vadd.f32 %v494, %v496
        %v503 = vadd.f32 %v502, %v498
        %v504 = vadd.f32 %v503, %v500
        %v505 = vrot.slane %v504, 4
        %v506 = vadd.f32 %v504, %v505
        %v507 = vrot.slane %v506, 2
        %v508 = vadd.f32 %v506, %v507
        %v509 = vrot.slane %v508, 1
        %v510 = vadd.f32 %v508, %v509
        %v511 = vadd.f32 %v495, %v497
        %v512 = vadd.f32 %v511, %v499
        %v513 = vadd.f32 %v512, %v501
        %v514 = vrot.slane %v513, 4
        %v515 = vadd.f32 %v513, %v514
        %v516 = vrot.slane %v515, 2
        %v517 = vadd.f32 %v515, %v516
        %v518 = vrot.slane %v517, 1
        %v519 = vadd.f32 %v517, %v518
        %v520 = vxor.u32 %v510, 2147483648
        %v521 = vxor.u32 %v519, 2147483648
        %v522 = vmul.f32 %v520, 1.442695
        %v523 = vpow.pop %v522
        %v524 = vmul.f32 %v521, 1.442695
        %v525 = vpow.pop %v524
        %v526 = vadd.f32 %v523, 1.0
        %v527 = vadd.f32 %v525, 1.0
        %v528 = vrcp.pop %v526
        %v529 = vmul.f32 1.0, %v528
        %v530 = vrcp.pop %v527
        %v531 = vmul.f32 1.0, %v530
        %v532 = vlaneseq
        %v533 = vshrl.u32 %v532, 7
        %v534 = vsub.s32 0, %v533
        %v535 = vrot.slane %v469, %v534
        %537 = vbcast.lane.b32.xlu0 %v535, 256
        %v538 = vpop.permute.xlu0 %537
        %s540 = sor.u32 256, 8
        %541 = vbcast.lane.b32.xlu0 %v535, %s540
        %v542 = vpop.permute.xlu0 %541
        %s544 = sor.u32 256, 16
        %545 = vbcast.lane.b32.xlu0 %v535, %s544
        %v546 = vpop.permute.xlu0 %545
        %s548 = sor.u32 256, 24
        %549 = vbcast.lane.b32.xlu0 %v535, %s548
        %v550 = vpop.permute.xlu0 %549
        %v551 = vadd.f32 %v538, %v529
        %v552 = vadd.f32 %v538, %v531
        %v553 = vadd.f32 %v542, %v529
        %v554 = vadd.f32 %v542, %v531
        %v555 = vadd.f32 %v546, %v529
        %v556 = vadd.f32 %v546, %v531
        %v557 = vadd.f32 %v550, %v529
        %v558 = vadd.f32 %v550, %v531
        %v559 = vmul.f32 %v270, %v551
        %v560 = vmul.f32 %v271, %v552
        %v561 = vmul.f32 %v272, %v553
        %v562 = vmul.f32 %v273, %v554
        %v563 = vmul.f32 %v274, %v555
        %v564 = vmul.f32 %v275, %v556
        %v565 = vmul.f32 %v276, %v557
        %v566 = vmul.f32 %v277, %v558
        %567 = vst [vmem:[%s269] sm:$0xff] %v559
        %568 = vst [vmem:[%s269 + $0x8] sm:$0xff] %v560
        %569 = vst [vmem:[%s269 + $0x10] sm:$0xff] %v561
        %570 = vst [vmem:[%s269 + $0x18] sm:$0xff] %v562
        %571 = vst [vmem:[%s269 + $0x20] sm:$0xff] %v563
        %572 = vst [vmem:[%s269 + $0x28] sm:$0xff] %v564
        %573 = vst [vmem:[%s269 + $0x30] sm:$0xff] %v565
        %574 = vst [vmem:[%s269 + $0x38] sm:$0xff] %v566
        %s575 = sand.u32 %s162, 1
        %s576 = scalar_lea.sflag [#allocation4], %s575
        %s577 = sand.u32 %s162, 1
        %s578 = smul.addr %s577, 64
        %s579 = scalar_lea.vmem [#allocation5], %s578
        // Predicated region
        $region49: #{tpu_custom_call.1} parent=43 // pred_check
          %p580 = pneg %p172
        $region50: #{tpu_custom_call.1} parent=43 // pred_check_branch
          %582 = sbr.rel (%p580) target = $region52
        $region51: #{tpu_custom_call.1} parent=43 // pred_region
          %s584 = ssub.s32 1024, 1024
          %585 = vsyncadd %s576, %s584
          %s586 = smul.addr %s23, 8
          %s587 = smul.addr %s586, 128
          %s588 = scalar_lea.hbm %s6, %s587
          %s589 = sshll.u32 %s579, 4
          %s590 = int_to_ptr.vmem [resolvable:$true] %s589
          %595 = dma.vmem_to_hbm [thread:$0]  %s590, 1024, %s588, %s576, 256, 256, 16
        $region52: #{tpu_custom_call.1} parent=43 // pred_fallthru
          _
      $region44: #{tpu_custom_call.1} parent=5 // pred_fallthru
        _
      %p596 = scmp.le.s32.totalorder 2, %s18
      // Predicated region
      $region53: #{tpu_custom_call.1} parent=5 // pred_check
        %p597 = pneg %p596
      $region54: #{tpu_custom_call.1} parent=5 // pred_check_branch
        %599 = sbr.rel (%p597) target = $region56
      $region55: #{tpu_custom_call.1} parent=5 // pred_region
        %s600 = ssub.s32 %s18, 2
        // Predicated region
        $region57: #{tpu_custom_call.1} parent=55 // pred_check
          %p601 = pneg %p178
        $region58: #{tpu_custom_call.1} parent=55 // pred_check_branch
          %603 = sbr.rel (%p601) target = $region60
        $region59: #{tpu_custom_call.1} parent=55 // pred_region
          %s604 = sand.u32 %s163, 1
          %s605 = scalar_lea.sflag [#allocation4], %s604
          %s606 = sand.u32 %s163, 1
          %s607 = smul.addr %s606, 64
          %s608 = scalar_lea.vmem [#allocation5], %s607
          %609 = dma.done %s605, 1024
        $region60: #{tpu_custom_call.1} parent=55 // pred_fallthru
          _
      $region56: #{tpu_custom_call.1} parent=5 // pred_fallthru
        _
    $region6: #{tpu_custom_call.1} parent=1 // loop_footer
      %s22 = sadd.s32 1, %s18
    $region7: #{tpu_custom_call.1} parent=1 // loop_footer_branch
      %17 = sbr.rel target = $region3
    $region8: #{tpu_custom_call.1} parent=1 // loop_exit
      _
    %610 = vsyncpa [#allocation3], 1
    %s611 = scalar_lea.sflag [#allocation3], 1
    %612 = vsyncpa %s611, 1
    %613 = vsyncpa [#allocation4], 1
    %s614 = scalar_lea.sflag [#allocation4], 1
    %615 = vsyncpa %s614, 1

</llo_original>
